<compile_context>
chip_gen: v7x
topology: tpu7x:2x2x1
jax: 0.10.0
libtpu: 0.0.40
codegen_flags: <defaults>
</compile_context>

<pallas_src>
import functools

import jax
import jax.numpy as jnp
from jax.experimental import pallas as pl
from jax.experimental.pallas import tpu as pltpu

LANE = 128


def _round_up(n, m):
    return ((n + m - 1) // m) * m


def actor_net_kernel(x_ref, w1_ref, b1_ref, wh_ref, bh_ref, out_ref, *, head_pad):
    # Layer 1: MXU matmul (bf16 operands by default), f32 accumulate;
    # bias + relu stay in f32 on the VPU.
    h = jnp.dot(x_ref[...], w1_ref[...], preferred_element_type=jnp.float32)
    h = jnp.maximum(h + b1_ref[...], 0.0)

    # Fused heads: one MXU matmul producing [mu_block | sigma_block] packed in
    # a single lane-dense slab of width 2*head_pad (a multiple of 128).
    z = jnp.dot(h.astype(wh_ref.dtype), wh_ref[...],
                preferred_element_type=jnp.float32)
    z = z + bh_ref[...]

    # Per-column select: columns < head_pad belong to the mu head (tanh), the
    # rest to the sigma head (numerically stable softplus).  Both activations
    # run on the EUP; the select is a cheap VPU op, and we avoid any
    # non-128-aligned slicing inside the kernel.
    mu = jnp.tanh(z)
    sp = jnp.maximum(z, 0.0) + jnp.log1p(jnp.exp(-jnp.abs(z)))
    col = jax.lax.broadcasted_iota(jnp.int32, z.shape, 1)
    out_ref[...] = jnp.where(col < head_pad, mu, sp)


def prepare_params(params, weight_dtype=jnp.bfloat16):
    """One-time layout transform (call once, reuse across forwards).

    * Transposes weights to (in, out) and pads the hidden dim to a multiple of
      128 (lane-dense h, 128-aligned head contraction).
    * Fuses the mu/sigma heads into one (Hp, 2*head_pad) weight + (1, 2*head_pad)
      bias; each head is padded to a multiple of 64 columns so for O<=64 both
      heads share a single 128-lane output block.
    * Streams weights in `weight_dtype` (bf16 by default); biases and all
      post-matmul math remain f32.
    Padded rows/columns are zero -> numerically inert for the sliced outputs.
    """
    w1, b1 = params["l1.weight"], params["l1.bias"]          # (H, F), (H,)
    wmu, bmu = params["mu.weight"], params["mu.bias"]        # (O, H), (O,)
    wsg, bsg = params["sigma.weight"], params["sigma.bias"]  # (O, H), (O,)

    H, F = w1.shape
    O = wmu.shape[0]
    Hp = _round_up(H, LANE)
    head_pad = _round_up(O, LANE // 2)       # multiple of 64
    # two_o = 2 * head_pad is then a multiple of 128 (lane-dense output slab).

    w1_t = jnp.asarray(w1, jnp.float32).T                      # (F, H)
    w1_t = jnp.pad(w1_t, ((0, 0), (0, Hp - H)))                # (F, Hp)
    b1_r = jnp.pad(jnp.asarray(b1, jnp.float32).reshape(1, H),
                   ((0, 0), (0, Hp - H)))                      # (1, Hp)

    def pad_head(w, b):
        wt = jnp.asarray(w, jnp.float32).T                     # (H, O)
        wt = jnp.pad(wt, ((0, Hp - H), (0, head_pad - O)))     # (Hp, head_pad)
        br = jnp.pad(jnp.asarray(b, jnp.float32).reshape(1, O),
                     ((0, 0), (0, head_pad - O)))              # (1, head_pad)
        return wt, br

    wmu_t, bmu_r = pad_head(wmu, bmu)
    wsg_t, bsg_r = pad_head(wsg, bsg)

    w_head = jnp.concatenate([wmu_t, wsg_t], axis=1)           # (Hp, 2*head_pad)
    b_head = jnp.concatenate([bmu_r, bsg_r], axis=1)           # (1, 2*head_pad)

    w1_t = w1_t.astype(weight_dtype)
    w_head = w_head.astype(weight_dtype)

    prepped = {
        "w1_t": w1_t, "b1": b1_r,
        "w_head": w_head, "b_head": b_head,
        "n_outputs": O, "head_pad": head_pad,
    }
    jax.block_until_ready((w1_t, b1_r, w_head, b_head))
    return prepped


def _choose_batch_tile(B, cap):
    """Pick (TB, padded_B).  TB bounds per-step VMEM independently of B and
    keeps the grid >= 2 for large B (so the 'parallel' batch axis can shard
    across both TensorCores on v7x)."""
    cap = max(8, (cap // 8) * 8)
    if B <= cap:
        return B, B                       # single full-array block
    for tb in range(cap, 7, -8):          # largest multiple-of-8 divisor <= cap
        if B % tb == 0:
            return tb, B
    return cap, _round_up(B, cap)         # otherwise pad B up to a tile multiple


def actor_net_forward(x, prepped, *, batch_tile=256):
    """x: (B, n_features) float32.  prepped: output of prepare_params."""
    w1_t, b1 = prepped["w1_t"], prepped["b1"]
    w_head, b_head = prepped["w_head"], prepped["b_head"]
    O, head_pad = prepped["n_outputs"], prepped["head_pad"]

    B, F = x.shape
    Hp = w1_t.shape[1]
    two_o = 2 * head_pad
    wdt = w1_t.dtype
    wsize = jnp.dtype(wdt).itemsize

    TB, Bp = _choose_batch_tile(B, batch_tile)
    grid = (Bp // TB,)

    x_in = x.astype(wdt)                  # halves x DMA bytes when wdt == bf16
    if Bp != B:
        x_in = jnp.pad(x_in, ((0, Bp - B), (0, 0)))

    # Explicit VMEM budget: double-buffered x / out blocks, weights counted
    # double-buffered (conservative), plus f32 intermediates (h / z / mu / sp).
    x_blk = TB * F * wsize
    out_blk = TB * two_o * 4
    w_bytes = (F * Hp + Hp * two_o) * wsize + (Hp + two_o) * 4
    interm = 6 * TB * max(Hp, two_o) * 4
    vmem_limit = int(1.5 * (2 * x_blk + 2 * out_blk + 2 * w_bytes + interm)) + (2 << 20)
    vmem_limit = max(8 << 20, min(vmem_limit, 64 << 20))

    cost = pl.CostEstimate(
        flops=2 * Bp * (F * Hp + Hp * two_o),
        # tanh + exp + log1p are each evaluated over the full (Bp, two_o) slab.
        transcendentals=3 * Bp * two_o,
        bytes_accessed=(Bp * F + F * Hp + Hp * two_o) * wsize
        + (Hp + two_o) * 4 + Bp * two_o * 4,
    )

    out = pl.pallas_call(
        functools.partial(actor_net_kernel, head_pad=head_pad),
        out_shape=jax.ShapeDtypeStruct((Bp, two_o), jnp.float32),
        grid=grid,
        in_specs=[
            pl.BlockSpec((TB, F), lambda i: (i, 0)),        # x: streamed over batch
            pl.BlockSpec((F, Hp), lambda i: (0, 0)),        # w1_t: resident
            pl.BlockSpec((1, Hp), lambda i: (0, 0)),        # b1: resident
            pl.BlockSpec((Hp, two_o), lambda i: (0, 0)),    # fused head W: resident
            pl.BlockSpec((1, two_o), lambda i: (0, 0)),     # fused head b: resident
        ],
        out_specs=pl.BlockSpec((TB, two_o), lambda i: (i, 0)),
        compiler_params=pltpu.CompilerParams(
            dimension_semantics=("parallel",),              # megacore batch sharding
            vmem_limit_bytes=vmem_limit),
        cost_estimate=cost,
    )(x_in, w1_t, b1, w_head, b_head)

    if Bp != B:
        out = out[:B]
    mu = out[:, :O]
    sigma = out[:, head_pad:head_pad + O]
    return mu, sigma


def init_params(key, n_features, n_hidden, n_outputs):
    """Deterministic init mirroring nn.Linear's U(-1/sqrt(fan_in), 1/sqrt(fan_in))."""
    ks = jax.random.split(key, 6)

    def linear(kw, kb, fan_in, fan_out):
        bound = 1.0 / jnp.sqrt(jnp.float32(fan_in))
        w = jax.random.uniform(kw, (fan_out, fan_in), jnp.float32, -bound, bound)
        b = jax.random.uniform(kb, (fan_out,), jnp.float32, -bound, bound)
        return w, b

    w1, b1 = linear(ks[0], ks[1], n_features, n_hidden)
    wmu, bmu = linear(ks[2], ks[3], n_hidden, n_outputs)
    wsg, bsg = linear(ks[4], ks[5], n_hidden, n_outputs)
    return {
        "l1.weight": w1, "l1.bias": b1,
        "mu.weight": wmu, "mu.bias": bmu,
        "sigma.weight": wsg, "sigma.bias": bsg,
    }


def _reference(x, p):
    """Pure-f32 reference matching the PyTorch module exactly."""
    h = jnp.maximum(x @ p["l1.weight"].T + p["l1.bias"], 0.0)
    mu = jnp.tanh(h @ p["mu.weight"].T + p["mu.bias"])
    sigma = jax.nn.softplus(h @ p["sigma.weight"].T + p["sigma.bias"])
    return mu, sigma


def _reference_quantized(x, p, dtype):
    """Reference applying the same weight/activation quantization the kernel
    uses (operands rounded to `dtype`, f32 accumulation and f32 epilogue)."""
    def q(a):
        return jnp.asarray(a, jnp.float32).astype(dtype).astype(jnp.float32)
    h = jnp.maximum(q(x) @ q(p["l1.weight"]).T + p["l1.bias"], 0.0)
    mu = jnp.tanh(q(h) @ q(p["mu.weight"]).T + p["mu.bias"])
    sigma = jax.nn.softplus(q(h) @ q(p["sigma.weight"]).T + p["sigma.bias"])
    return mu, sigma


if __name__ == "__main__":
    B, n_features, n_hidden, n_outputs = 2, 8, 32, 4

    key = jax.random.PRNGKey(0)
    k_x, k_x2, k_p = jax.random.split(key, 3)
    x = jax.random.normal(k_x, (B, n_features), dtype=jnp.float32)
    params = init_params(k_p, n_features, n_hidden, n_outputs)

    # One-time layout prep (hoisted out of the per-call path); bf16 weights.
    prepped = prepare_params(params)

    mu, sigma = actor_net_forward(x, prepped)
    jax.block_until_ready((mu, sigma))

    assert mu.shape == (B, n_outputs) and sigma.shape == (B, n_outputs)
    mu_q, sg_q = _reference_quantized(x, params, prepped["w1_t"].dtype)
    assert jnp.allclose(mu, mu_q, atol=2e-4, rtol=2e-4)
    assert jnp.allclose(sigma, sg_q, atol=2e-4, rtol=2e-4)
    mu_f, sg_f = _reference(x, params)
    assert jnp.allclose(mu, mu_f, atol=5e-2, rtol=5e-2)
    assert jnp.allclose(sigma, sg_f, atol=5e-2, rtol=5e-2)
    assert bool(jnp.all(sigma > 0.0))

    # Exercise the tiled / padded batch path: B=300 has no multiple-of-8
    # divisor <= 256, so B is padded to 512 -> TB=256, grid=(2,), which also
    # lets the 'parallel' batch axis shard across both v7x TensorCores.
    Bl = 300
    xl = jax.random.normal(k_x2, (Bl, n_features), dtype=jnp.float32)
    mu_l, sg_l = actor_net_forward(xl, prepped, batch_tile=256)
    jax.block_until_ready((mu_l, sg_l))
    assert mu_l.shape == (Bl, n_outputs) and sg_l.shape == (Bl, n_outputs)
    mu_lq, sg_lq = _reference_quantized(xl, params, prepped["w1_t"].dtype)
    assert jnp.allclose(mu_l, mu_lq, atol=2e-4, rtol=2e-4)
    assert jnp.allclose(sg_l, sg_lq, atol=2e-4, rtol=2e-4)

    print("KERNEL_OK")
</pallas_src>

<mosaic_0001>
module attributes {stable_mosaic.version = 11 : i64} {
  func.func @actor_net_kernel(%arg0: i32, %arg1: memref<2x8xbf16, #tpu.memory_space<vmem>>, %arg2: memref<8x128xbf16, #tpu.memory_space<vmem>>, %arg3: memref<1x128xf32, #tpu.memory_space<vmem>>, %arg4: memref<128x128xbf16, #tpu.memory_space<vmem>>, %arg5: memref<1x128xf32, #tpu.memory_space<vmem>>, %arg6: memref<2x128xf32, #tpu.memory_space<vmem>>) attributes {dimension_semantics = [#tpu.dimension_semantics<parallel>], iteration_bounds = array<i64: 1>, scalar_prefetch = 0 : i64, scratch_operands = 0 : i64, tpu.core_type = #tpu.core_type<tc>, window_params = [{transform_indices = @transform_0, window_bounds = array<i64: 2, 8>}, {pipeline_mode = #tpu.pipeline_mode<synchronous>, transform_indices = @transform_1, window_bounds = array<i64: 8, 128>}, {pipeline_mode = #tpu.pipeline_mode<synchronous>, transform_indices = @transform_2, window_bounds = array<i64: 1, 128>}, {pipeline_mode = #tpu.pipeline_mode<synchronous>, transform_indices = @transform_3, window_bounds = array<i64: 128, 128>}, {pipeline_mode = #tpu.pipeline_mode<synchronous>, transform_indices = @transform_4, window_bounds = array<i64: 1, 128>}, {transform_indices = @transform_5, window_bounds = array<i64: 2, 128>}]} {
    %c0 = arith.constant 0 : index
    %c0_0 = arith.constant 0 : index
    %0 = vector.load %arg1[%c0, %c0_0] : memref<2x8xbf16, #tpu.memory_space<vmem>>, vector<2x8xbf16>
    %c0_1 = arith.constant 0 : index
    %c0_2 = arith.constant 0 : index
    %1 = vector.load %arg2[%c0_1, %c0_2] : memref<8x128xbf16, #tpu.memory_space<vmem>>, vector<8x128xbf16>
    %cst = arith.constant dense<0.000000e+00> : vector<2x128xf32>
    %2 = tpu.matmul %0, %1, %cst {dimension_numbers = #tpu.dot_dimension_numbers<[1], [0], [0], [1], [0, 0, 1, 1], [], []>} : vector<2x8xbf16>, vector<8x128xbf16>, vector<2x128xf32> -> vector<2x128xf32>
    %c0_3 = arith.constant 0 : index
    %c0_4 = arith.constant 0 : index
    %3 = vector.load %arg3[%c0_3, %c0_4] : memref<1x128xf32, #tpu.memory_space<vmem>>, vector<1x128xf32>
    %4 = vector.broadcast %3 : vector<1x128xf32> to vector<2x128xf32>
    %5 = arith.addf %2, %4 : vector<2x128xf32>
    %cst_5 = arith.constant 0.000000e+00 : f32
    %6 = vector.broadcast %cst_5 : f32 to vector<2x128xf32>
    %7 = arith.maximumf %5, %6 : vector<2x128xf32>
    %8 = arith.truncf %7 : vector<2x128xf32> to vector<2x128xbf16>
    %c0_6 = arith.constant 0 : index
    %c0_7 = arith.constant 0 : index
    %9 = vector.load %arg4[%c0_6, %c0_7] : memref<128x128xbf16, #tpu.memory_space<vmem>>, vector<128x128xbf16>
    %cst_8 = arith.constant dense<0.000000e+00> : vector<2x128xf32>
    %10 = tpu.matmul %8, %9, %cst_8 {dimension_numbers = #tpu.dot_dimension_numbers<[1], [0], [0], [1], [0, 0, 1, 1], [], []>} : vector<2x128xbf16>, vector<128x128xbf16>, vector<2x128xf32> -> vector<2x128xf32>
    %c0_9 = arith.constant 0 : index
    %c0_10 = arith.constant 0 : index
    %11 = vector.load %arg5[%c0_9, %c0_10] : memref<1x128xf32, #tpu.memory_space<vmem>>, vector<1x128xf32>
    %12 = vector.broadcast %11 : vector<1x128xf32> to vector<2x128xf32>
    %13 = arith.addf %10, %12 : vector<2x128xf32>
    %14 = math.tanh %13 : vector<2x128xf32>
    %cst_11 = arith.constant 0.000000e+00 : f32
    %15 = vector.broadcast %cst_11 : f32 to vector<2x128xf32>
    %16 = arith.maximumf %13, %15 : vector<2x128xf32>
    %17 = math.absf %13 : vector<2x128xf32>
    %cst_12 = arith.constant 0.000000e+00 : f32
    %18 = vector.broadcast %cst_12 : f32 to vector<2x128xf32>
    %19 = arith.subf %18, %17 : vector<2x128xf32>
    %20 = math.exp %19 : vector<2x128xf32>
    %21 = math.log1p %20 : vector<2x128xf32>
    %22 = arith.addf %16, %21 : vector<2x128xf32>
    %23 = tpu.iota {dimensions = array<i32: 1>} : vector<2x128xi32>
    %c64_i32 = arith.constant 64 : i32
    %24 = vector.broadcast %c64_i32 : i32 to vector<2x128xi32>
    %25 = arith.cmpi slt, %23, %24 : vector<2x128xi32>
    %26 = arith.select %25, %14, %22 : vector<2x128xi1>, vector<2x128xf32>
    %c0_13 = arith.constant 0 : index
    %c0_14 = arith.constant 0 : index
    %27 = vector.load %arg6[%c0_13, %c0_14] : memref<2x128xf32, #tpu.memory_space<vmem>>, vector<2x128xf32>
    tpu.vector_store %arg6[%c0_13, %c0_14], %26 {strides = array<i32>} : memref<2x128xf32, #tpu.memory_space<vmem>>, vector<2x128xf32>,
    return
  }
  func.func @transform_0(%arg0: i32) -> (i32, i32) {
    %c0_i32 = arith.constant 0 : i32
    %c0_i32_0 = arith.constant 0 : i32
    return %arg0, %c0_i32 : i32, i32
  }
  func.func @transform_1(%arg0: i32) -> (i32, i32) {
    %c0_i32 = arith.constant 0 : i32
    %c0_i32_0 = arith.constant 0 : i32
    %c0_i32_1 = arith.constant 0 : i32
    return %c0_i32, %c0_i32_0 : i32, i32
  }
  func.func @transform_2(%arg0: i32) -> (i32, i32) {
    %c0_i32 = arith.constant 0 : i32
    %c0_i32_0 = arith.constant 0 : i32
    %c0_i32_1 = arith.constant 0 : i32
    return %c0_i32, %c0_i32_0 : i32, i32
  }
  func.func @transform_3(%arg0: i32) -> (i32, i32) {
    %c0_i32 = arith.constant 0 : i32
    %c0_i32_0 = arith.constant 0 : i32
    %c0_i32_1 = arith.constant 0 : i32
    return %c0_i32, %c0_i32_0 : i32, i32
  }
  func.func @transform_4(%arg0: i32) -> (i32, i32) {
    %c0_i32 = arith.constant 0 : i32
    %c0_i32_0 = arith.constant 0 : i32
    %c0_i32_1 = arith.constant 0 : i32
    return %c0_i32, %c0_i32_0 : i32, i32
  }
  func.func @transform_5(%arg0: i32) -> (i32, i32) {
    %c0_i32 = arith.constant 0 : i32
    %c0_i32_0 = arith.constant 0 : i32
    return %arg0, %c0_i32 : i32, i32
  }
}

</mosaic_0001>

<llo_original>
// kernel: tpu_custom_call.1
$region0: #{tpu_custom_call.1}
  #allocation0 [shape = 'u32[]', space=smem, size = 0x4, offset = 0x4, fixed_abs, tag = 'smem constant byte address 0x4 - core index']
  #allocation1 [shape = 'u32[144,128]{1,0:T(1,128)}', space=vmem, size = 0x12000, scoped, tag = 'internal scratch']
  %s0 = inlined_call_operand.hbm [shape: bf16[2,8], index: 0, kind: input, shape index: {}]
  %s1 = inlined_call_operand.hbm [shape: bf16[8,128], index: 1, kind: input, shape index: {}]
  %s2 = inlined_call_operand.vmem [shape: f32[1,128], index: 2, kind: input, shape index: {}]
  %s3 = inlined_call_operand.hbm [shape: bf16[128,128], index: 3, kind: input, shape index: {}]
  %s4 = inlined_call_operand.vmem [shape: f32[1,128], index: 4, kind: input, shape index: {}]
  %s5 = inlined_call_operand.hbm [shape: f32[2,128], index: 5, kind: output, shape index: {}]
  %s6 = sld [smem:[#allocation0]]
  $region42: #{tpu_custom_call.1} parent=0
    _
  %s8 = ssub.s32 1, %s6
  %s9 = scalar_select 0, %s8, %s6
  $region1: #{tpu_custom_call.1} parent=0
    #allocation2 [shape = 'u8[512]{0}', space=vmem, size = 0x400, scoped, tag = 'input window, operand 0, single buffered']
    #allocation3 [shape = 's32[1]{0}', space=sflag, size = 0x4, scoped, tag = 'scoped memory for tpu_custom_call.1']
    #allocation4 [shape = 's32[1]{0}', space=sflag, size = 0x4, scoped, tag = 'scoped memory for tpu_custom_call.1']
    #allocation5 [shape = 'u8[2048]{0}', space=vmem, size = 0x800, scoped, tag = 'input window, operand 1, single buffered']
    #allocation6 [shape = 's32[1]{0}', space=sflag, size = 0x4, scoped, tag = 'scoped memory for tpu_custom_call.1']
    #allocation7 [shape = 'u8[32768]{0}', space=vmem, size = 0x8000, scoped, tag = 'input window, operand 3, single buffered']
    #allocation8 [shape = 'u8[1024]{0}', space=vmem, size = 0x400, scoped, tag = 'output window, operand 0, single buffered']
    %10 = vsyncpa [#allocation3], 0
    %11 = vsyncpa [#allocation6], 0
    %12 = vsyncpa [#allocation4], 0
    // Predicated region
    $region2: #{tpu_custom_call.1} parent=1 // pred_check
      _
    $region3: #{tpu_custom_call.1} parent=1 // pred_check_branch
      %14 = sbr.rel (0) target = $region5
    $region4: #{tpu_custom_call.1} parent=1 // pred_region
      %s16 = ssub.s32 16, 16
      %17 = vsyncadd [#allocation3], %s16
      %s19 = sshll.u32 [#allocation2], 4
      %s20 = int_to_ptr.vmem [resolvable:$true] %s19
      %22 = dma.hbm_to_vmem [thread:$0]  %s0, 16, %s20, [#allocation3]
    $region5: #{tpu_custom_call.1} parent=1 // pred_fallthru
      _
    // Predicated region
    $region6: #{tpu_custom_call.1} parent=1 // pred_check
      _
    $region7: #{tpu_custom_call.1} parent=1 // pred_check_branch
      %24 = sbr.rel (0) target = $region9
    $region8: #{tpu_custom_call.1} parent=1 // pred_region
      %s26 = ssub.s32 64, 64
      %27 = vsyncadd [#allocation6], %s26
      %s29 = sshll.u32 [#allocation5], 4
      %s30 = int_to_ptr.vmem [resolvable:$true] %s29
      %32 = dma.hbm_to_vmem [thread:$0]  %s1, 64, %s30, [#allocation6]
    $region9: #{tpu_custom_call.1} parent=1 // pred_fallthru
      _
    // Predicated region
    $region10: #{tpu_custom_call.1} parent=1 // pred_check
      _
    $region11: #{tpu_custom_call.1} parent=1 // pred_check_branch
      %34 = sbr.rel (0) target = $region13
    $region12: #{tpu_custom_call.1} parent=1 // pred_region
      _
    $region13: #{tpu_custom_call.1} parent=1 // pred_fallthru
      _
    // Predicated region
    $region14: #{tpu_custom_call.1} parent=1 // pred_check
      _
    $region15: #{tpu_custom_call.1} parent=1 // pred_check_branch
      %36 = sbr.rel (0) target = $region17
    $region16: #{tpu_custom_call.1} parent=1 // pred_region
      %s38 = ssub.s32 1024, 1024
      %39 = vsyncadd [#allocation6], %s38
      %s40 = sshll.u32 [#allocation7], 4
      %s41 = int_to_ptr.vmem [resolvable:$true] %s40
      %46 = dma.hbm_to_vmem [thread:$0]  %s3, 1024, %s41, [#allocation6], 64, 64, 4
    $region17: #{tpu_custom_call.1} parent=1 // pred_fallthru
      _
    // Predicated region
    $region18: #{tpu_custom_call.1} parent=1 // pred_check
      _
    $region19: #{tpu_custom_call.1} parent=1 // pred_check_branch
      %48 = sbr.rel (0) target = $region21
    $region20: #{tpu_custom_call.1} parent=1 // pred_region
      _
    $region21: #{tpu_custom_call.1} parent=1 // pred_fallthru
      _
    // Predicated region
    $region22: #{tpu_custom_call.1} parent=1 // pred_check
      _
    $region23: #{tpu_custom_call.1} parent=1 // pred_check_branch
      %50 = sbr.rel (0) target = $region25
    $region24: #{tpu_custom_call.1} parent=1 // pred_region
      %51 = dma.done [#allocation3], 16
    $region25: #{tpu_custom_call.1} parent=1 // pred_fallthru
      _
    // Predicated region
    $region26: #{tpu_custom_call.1} parent=1 // pred_check
      _
    $region27: #{tpu_custom_call.1} parent=1 // pred_check_branch
      %53 = sbr.rel (0) target = $region29
    $region28: #{tpu_custom_call.1} parent=1 // pred_region
      %54 = dma.done [#allocation6], 64
    $region29: #{tpu_custom_call.1} parent=1 // pred_fallthru
      _
    // Predicated region
    $region30: #{tpu_custom_call.1} parent=1 // pred_check
      _
    $region31: #{tpu_custom_call.1} parent=1 // pred_check_branch
      %56 = sbr.rel (0) target = $region33
    $region32: #{tpu_custom_call.1} parent=1 // pred_region
      %57 = dma.done [#allocation6], 1024
    $region33: #{tpu_custom_call.1} parent=1 // pred_fallthru
      _
    %v59 = vld [vmem:[#allocation2] sm:$0x1]
    %v60 = vld [vmem:[#allocation5] sm:$0xf]
    %v61 = vld [vmem:[%s2] sm:$0x1]
    %v63 = vlaneseq
    %v64 = vshrl.u32 %v63, 7
    %v65 = vsub.s32 0, %v64
    %v66 = vrot.slane %v61, %v65
    %vm68 = vcmask 64512
    %v70 = vsel %vm68, %v59, 0
    %vm72 = vcmask 1043456
    %v74 = vsel %vm72, %v60, 0
    %76 = vmatprep.subr.bf16.mxu0 0
    %77 = vmatpush1.bf16.msra.mxu0 %v74
    %78 = vmatprep.subr.bf16.mxu0 0
    %79 = vmatpush1.bf16.msra.mxu0 0
    %80 = vmatprep.subr.bf16.mxu0 0
    %81 = vmatpush1.bf16.msra.mxu0 0
    %82 = vmatprep.subr.bf16.mxu0 0
    %83 = vmatpush1.bf16.msra.mxu0 0
    %84 = vmatprep.subr.bf16.mxu0 0
    %85 = vmatpush1.bf16.msra.mxu0 0
    %86 = vmatprep.subr.bf16.mxu0 0
    %87 = vmatpush1.bf16.msra.mxu0 0
    %88 = vmatprep.subr.bf16.mxu0 0
    %89 = vmatpush1.bf16.msra.mxu0 0
    %90 = vmatprep.subr.bf16.mxu0 0
    %91 = vmatpush1.bf16.msra.mxu0 0
    %92 = vmatprep.subr.bf16.mxu0 0
    %93 = vmatpush1.bf16.msra.mxu0 0
    %94 = vmatprep.subr.bf16.mxu0 0
    %95 = vmatpush1.bf16.msra.mxu0 0
    %96 = vmatprep.subr.bf16.mxu0 0
    %97 = vmatpush1.bf16.msra.mxu0 0
    %98 = vmatprep.subr.bf16.mxu0 0
    %99 = vmatpush1.bf16.msra.mxu0 0
    %100 = vmatprep.subr.bf16.mxu0 0
    %101 = vmatpush1.bf16.msra.mxu0 0
    %102 = vmatprep.subr.bf16.mxu0 0
    %103 = vmatpush1.bf16.msra.mxu0 0
    %104 = vmatprep.subr.bf16.mxu0 0
    %105 = vmatpush1.bf16.msra.mxu0 0
    %106 = vmatprep.subr.bf16.mxu0 0
    %107 = vmatpush1.bf16.msra.mxu0 0
    %108 = vmatprep.mubr.bf16.mxu0 0
    %109 = vmatmul.mubr.bf16.gmra.mrb[0].mxu0 %v70
    %v110 = vpop.f32.mrb[0].mxu0
    %v111 = vadd.f32 %v66, %v110
    %v112 = vpop.f32.mrb[0].mxu0
    %v113 = vpop.f32.mrb[0].mxu0
    %v114 = vpop.f32.mrb[0].mxu0
    %115 = vdwg.mxu0
    %v116 = vmax.f32 %v111, 0.0
    %v117 = vpack.c.bf16 %v116, %v116
    %v118 = vld [vmem:[#allocation7] sm:$0xf]
    %v119 = vld [vmem:[#allocation7 + $0x4] sm:$0xf]
    %v120 = vld [vmem:[#allocation7 + $0x8] sm:$0xf]
    %v121 = vld [vmem:[#allocation7 + $0xc] sm:$0xf]
    %v122 = vld [vmem:[#allocation7 + $0x10] sm:$0xf]
    %v123 = vld [vmem:[#allocation7 + $0x14] sm:$0xf]
    %v124 = vld [vmem:[#allocation7 + $0x18] sm:$0xf]
    %v125 = vld [vmem:[#allocation7 + $0x1c] sm:$0xf]
    %v126 = vld [vmem:[#allocation7 + $0x20] sm:$0xf]
    %v127 = vld [vmem:[#allocation7 + $0x24] sm:$0xf]
    %v128 = vld [vmem:[#allocation7 + $0x28] sm:$0xf]
    %v129 = vld [vmem:[#allocation7 + $0x2c] sm:$0xf]
    %v130 = vld [vmem:[#allocation7 + $0x30] sm:$0xf]
    %v131 = vld [vmem:[#allocation7 + $0x34] sm:$0xf]
    %v132 = vld [vmem:[#allocation7 + $0x38] sm:$0xf]
    %v133 = vld [vmem:[#allocation7 + $0x3c] sm:$0xf]
    %v134 = vld [vmem:[%s4] sm:$0x1]
    %v136 = vlaneseq
    %v137 = vshrl.u32 %v136, 7
    %v138 = vsub.s32 0, %v137
    %v139 = vrot.slane %v134, %v138
    %v157 = vunpack.c.l.b16 %v118
    %v158 = vunpack.c.l.b16 %v119
    %v159 = vunpack.c.l.b16 %v120
    %v160 = vunpack.c.l.b16 %v121
    %v161 = vunpack.c.l.b16 %v122
    %v162 = vunpack.c.l.b16 %v123
    %v163 = vunpack.c.l.b16 %v124
    %v164 = vunpack.c.l.b16 %v125
    %v165 = vunpack.c.l.b16 %v126
    %v166 = vunpack.c.l.b16 %v127
    %v167 = vunpack.c.l.b16 %v128
    %v168 = vunpack.c.l.b16 %v129
    %v169 = vunpack.c.l.b16 %v130
    %v170 = vunpack.c.l.b16 %v131
    %v171 = vunpack.c.l.b16 %v132
    %v172 = vunpack.c.l.b16 %v133
    %v173 = vpack.c.b16 %v158, %v157
    %v174 = vpack.c.b16 %v160, %v159
    %v175 = vpack.c.b16 %v162, %v161
    %v176 = vpack.c.b16 %v164, %v163
    %v177 = vpack.c.b16 %v166, %v165
    %v178 = vpack.c.b16 %v168, %v167
    %v179 = vpack.c.b16 %v170, %v169
    %v180 = vpack.c.b16 %v172, %v171
    %189 = vmatprep.subr.bf16.mxu0 0
    %190 = vmatpush1.bf16.msra.mxu0 %v173
    %191 = vmatprep.subr.bf16.mxu0 0
    %192 = vmatpush1.bf16.msra.mxu0 %v174
    %193 = vmatprep.subr.bf16.mxu0 0
    %194 = vmatpush1.bf16.msra.mxu0 %v175
    %195 = vmatprep.subr.bf16.mxu0 0
    %196 = vmatpush1.bf16.msra.mxu0 %v176
    %197 = vmatprep.subr.bf16.mxu0 0
    %198 = vmatpush1.bf16.msra.mxu0 %v177
    %199 = vmatprep.subr.bf16.mxu0 0
    %200 = vmatpush1.bf16.msra.mxu0 %v178
    %201 = vmatprep.subr.bf16.mxu0 0
    %202 = vmatpush1.bf16.msra.mxu0 %v179
    %203 = vmatprep.subr.bf16.mxu0 0
    %204 = vmatpush1.bf16.msra.mxu0 %v180
    %205 = vmatprep.subr.bf16.mxu0 0
    %206 = vmatpush1.bf16.msra.mxu0 0
    %207 = vmatprep.subr.bf16.mxu0 0
    %208 = vmatpush1.bf16.msra.mxu0 0
    %209 = vmatprep.subr.bf16.mxu0 0
    %210 = vmatpush1.bf16.msra.mxu0 0
    %211 = vmatprep.subr.bf16.mxu0 0
    %212 = vmatpush1.bf16.msra.mxu0 0
    %213 = vmatprep.subr.bf16.mxu0 0
    %214 = vmatpush1.bf16.msra.mxu0 0
    %215 = vmatprep.subr.bf16.mxu0 0
    %216 = vmatpush1.bf16.msra.mxu0 0
    %217 = vmatprep.subr.bf16.mxu0 0
    %218 = vmatpush1.bf16.msra.mxu0 0
    %219 = vmatprep.subr.bf16.mxu0 0
    %220 = vmatpush1.bf16.msra.mxu0 0
    %221 = vmatprep.mubr.bf16.mxu0 0
    %222 = vmatmul.mubr.bf16.gmra.mrb[0].mxu0 %v117
    %v223 = vpop.f32.mrb[0].mxu0
    %v224 = vadd.f32 %v139, %v223
    %v225 = vpop.f32.mrb[0].mxu0
    %v226 = vpop.f32.mrb[0].mxu0
    %v227 = vpop.f32.mrb[0].mxu0
    %228 = vdwg.mxu0
    %v229 = vtanh.pop %v224
    %v230 = vmax.f32 %v224, 0.0
    %v231 = vand.u32 2147483647, %v224
    %v232 = vsub.f32 0.0, %v231
    %v233 = vmul.f32 %v232, 1.442695
    %v234 = vpow.pop %v233
    %v235 = vadd.f32 %v234, 1.0
    %v236 = vlog2.pop %v235
    %v237 = vmul.f32 %v236, 0.6931472
    %v238 = vmul.f32 -0.5, %v234
    %v239 = vadd.f32 %v238, 1.0
    %v240 = vmul.f32 %v239, %v234
    %v241 = vand.u32 2147483647, %v234
    %vm242 = vcmp.lt.f32.partialorder %v241, 0.0004427343
    %v243 = vsel %vm242, %v240, %v237
    %v244 = vadd.f32 %v230, %v243
    %v245 = vlaneseq
    %v246 = vand.u32 %v245, 127
    %vm247 = vcmp.lt.s32.totalorder %v246, 64
    %v248 = vsel %vm247, %v229, %v244
    %249 = vst [vmem:[#allocation8] sm:$0x3] %v248
    // Predicated region
    $region34: #{tpu_custom_call.1} parent=1 // pred_check
      _
    $region35: #{tpu_custom_call.1} parent=1 // pred_check_branch
      %251 = sbr.rel (0) target = $region37
    $region36: #{tpu_custom_call.1} parent=1 // pred_region
      %s253 = ssub.s32 32, 32
      %254 = vsyncadd [#allocation4], %s253
      %s256 = sshll.u32 [#allocation8], 4
      %s257 = int_to_ptr.vmem [resolvable:$true] %s256
      %259 = dma.vmem_to_hbm [thread:$0]  %s257, 32, %s5, [#allocation4]
    $region37: #{tpu_custom_call.1} parent=1 // pred_fallthru
      _
    // Predicated region
    $region38: #{tpu_custom_call.1} parent=1 // pred_check
      _
    $region39: #{tpu_custom_call.1} parent=1 // pred_check_branch
      %261 = sbr.rel (0) target = $region41
    $region40: #{tpu_custom_call.1} parent=1 // pred_region
      %262 = dma.done [#allocation4], 32
    $region41: #{tpu_custom_call.1} parent=1 // pred_fallthru
      _
    %263 = vsyncpa [#allocation3], 1
    %264 = vsyncpa [#allocation6], 1
    %265 = vsyncpa [#allocation4], 1

</llo_original>
